<compile_context>
chip_gen: v7x
topology: tpu7x:2x2x1
jax: 0.10.0
libtpu: 0.0.40
codegen_flags: <defaults>
</compile_context>

<pallas_src>
import functools

import jax
import jax.numpy as jnp
from jax.experimental import pallas as pl
from jax.experimental.pallas import tpu as pltpu

_LANE = 128
_SUBLANE = 8
_BATCH_TILE = 2048  # max rows per grid step (amortizes ~0.35us per-step overhead)


def _round_up(x: int, m: int) -> int:
    return ((x + m - 1) // m) * m


def _fused_mlp_kernel(*refs, num_layers: int, apply_relu: bool):
    """Whole MLP on one batch tile; activations never leave VMEM/vregs.

    refs = (x_ref, w0_ref, b0_ref, ..., w{L-1}_ref, b{L-1}_ref, o_ref)
      x_ref : (tb, in_dim)    -- true (unpadded) input width
      wi_ref: (in_i, out_i)   -- inter-layer dims padded to 128 lanes
      bi_ref: (1, out_i)
      o_ref : (tb, out_dim)   -- true (unpadded) output width
    """
    x_ref = refs[0]
    o_ref = refs[-1]
    h = x_ref[...]
    for i in range(num_layers):
        w = refs[1 + 2 * i][...]
        b = refs[2 + 2 * i][...]
        h = jnp.dot(h, w, preferred_element_type=jnp.float32) + b
        if apply_relu:
            h = jnp.maximum(h, 0.0)
    o_ref[...] = h.astype(o_ref.dtype)


def fused_mlp(x, kernel_params, *, apply_relu: bool,
              max_batch_tile: int = _BATCH_TILE):
    """x: (B, in_dim) f32.  kernel_params: [(W_i, b_i), ...] kernel-shaped."""
    num_layers = len(kernel_params)
    out_dim = kernel_params[-1][0].shape[1]
    B, in_dim = x.shape

    # Pick a batch tile: at most max_batch_tile rows, batch padded only to the
    # 8-row sublane granule (never rounded up to a full max-size tile).  Keep the
    # tile count even when >1 so v7x's two TensorCores split the "parallel" axis
    # evenly.
    b_sub = _round_up(B, _SUBLANE)
    n_tiles = pl.cdiv(b_sub, max_batch_tile)
    if n_tiles > 1 and n_tiles % 2 == 1:
        n_tiles += 1
    tb = _round_up(pl.cdiv(b_sub, n_tiles), _SUBLANE)
    b_tiled = n_tiles * tb
    if b_tiled != B:
        x = jnp.pad(x, ((0, b_tiled - B), (0, 0)))  # <= n_tiles*8 extra rows

    flat = []
    for w, b in kernel_params:
        flat.extend([w, b])

    kernel = functools.partial(
        _fused_mlp_kernel, num_layers=num_layers, apply_relu=apply_relu)

    # Streamed tensors tile only the batch axis at their TRUE widths (block last
    # dim == full array dim satisfies the (8,128) rule).  Weights / biases are
    # whole-array blocks with a constant index_map -> resident in VMEM, never
    # re-DMA'd per tile.
    in_specs = [pl.BlockSpec((tb, in_dim), lambda i: (i, 0))]
    for w, b in kernel_params:
        in_specs.append(pl.BlockSpec(w.shape, lambda i: (0, 0)))
        in_specs.append(pl.BlockSpec(b.shape, lambda i: (0, 0)))
    out_specs = pl.BlockSpec((tb, out_dim), lambda i: (i, 0))

    out = pl.pallas_call(
        kernel,
        out_shape=jax.ShapeDtypeStruct((b_tiled, out_dim), jnp.float32),
        grid=(n_tiles,),
        in_specs=in_specs,
        out_specs=out_specs,
        compiler_params=pltpu.CompilerParams(
            dimension_semantics=("parallel",)),  # v7x: shard over both TCs
    )(x, *flat)
    return out if b_tiled == B else out[:B]


class BasicMLPPallas:
    """JAX/Pallas re-implementation of Basic_MLP.forward (single fused kernel)."""

    def __init__(self, input_shape, hidden_sizes, *, use_relu=True, seed=0):
        self.input_shape = tuple(input_shape)
        self.hidden_sizes = list(hidden_sizes)
        self.use_relu = use_relu
        self.out_dim = self.hidden_sizes[-1]
        self.output_shapes = {"state": (self.out_dim,)}

        # Deterministic synthetic init ~ torch.nn.Linear defaults
        # (uniform(+-1/sqrt(fan_in)) for weight and bias).
        key = jax.random.PRNGKey(seed)
        self.params = []  # true-shape (in, out) weights, (out,) biases
        in_dim = self.input_shape[0]
        for h in self.hidden_sizes:
            key, kw, kb = jax.random.split(key, 3)
            bound = 1.0 / (in_dim ** 0.5)
            w = jax.random.uniform(kw, (in_dim, h), jnp.float32, -bound, bound)
            b = jax.random.uniform(kb, (h,), jnp.float32, -bound, bound)
            self.params.append((w, b))
            in_dim = h

        self.kernel_params = self._build_kernel_params()
        # TODO(synk): `normalize` (BatchNorm1d/LayerNorm) branch not implemented
        # (module default is None).

    def _build_kernel_params(self):
        if not self.use_relu:
            # activation=None: the stack is a linear composition -> fold it into
            # a single matmul + bias at init (halves MXU work in the kernel).
            w_f, b_f = self.params[0]
            for w, b in self.params[1:]:
                b_f = b_f @ w + b
                w_f = w_f @ w
            return [(w_f, b_f.reshape(1, -1))]

        kparams = []
        n = len(self.params)
        prev_true = self.input_shape[0]
        prev_k = prev_true  # layer-0 input width is NOT lane-padded (x streams at 16)
        for i, (w, b) in enumerate(self.params):
            h = w.shape[1]
            last = i == n - 1
            out_k = h if last else _round_up(h, _LANE)  # last layer keeps true width
            w_k = jnp.zeros((prev_k, out_k), jnp.float32).at[:prev_true, :h].set(w)
            b_k = jnp.zeros((1, out_k), jnp.float32).at[0, :h].set(b)
            kparams.append((w_k, b_k))
            prev_true, prev_k = h, out_k
        return kparams

    def forward(self, observations, *, max_batch_tile=_BATCH_TILE):
        x = jnp.asarray(observations, dtype=jnp.float32)
        y = fused_mlp(x, self.kernel_params, apply_relu=self.use_relu,
                      max_batch_tile=max_batch_tile)
        return {"state": y}


def _reference_forward(obs, params, use_relu):
    x = jnp.asarray(obs, jnp.float32)
    for w, b in params:
        x = x @ w + b
        if use_relu:
            x = jnp.maximum(x, 0.0)
    return x


if __name__ == "__main__":
    key = jax.random.PRNGKey(0)
    in_dim = 16
    hidden_sizes = [32, 32]

    ok = True

    # --- activation=nn.ReLU equivalent ---
    model = BasicMLPPallas((in_dim,), hidden_sizes, use_relu=True, seed=0)

    # Small batch: single-tile grid, no padding anywhere.
    key, k1 = jax.random.split(key)
    obs_small = jax.random.normal(k1, (8, in_dim), jnp.float32)
    out_small = jax.block_until_ready(model.forward(obs_small)["state"])
    ref_small = _reference_forward(obs_small, model.params, True)
    ok &= out_small.shape == (8, hidden_sizes[-1])
    ok &= bool(jnp.allclose(out_small, ref_small, atol=1e-4, rtol=1e-4))

    # Non-multiple-of-8 batch: exercises sublane pad + row slice-back.
    key, k2 = jax.random.split(key)
    obs_odd = jax.random.normal(k2, (13, in_dim), jnp.float32)
    out_odd = jax.block_until_ready(model.forward(obs_odd)["state"])
    ref_odd = _reference_forward(obs_odd, model.params, True)
    ok &= out_odd.shape == (13, hidden_sizes[-1])
    ok &= bool(jnp.allclose(out_odd, ref_odd, atol=1e-4, rtol=1e-4))

    # Larger batch with a reduced tile cap: exercises the multi-tile (even-grid)
    # path with resident weights.
    key, k3 = jax.random.split(key)
    obs_big = jax.random.normal(k3, (600, in_dim), jnp.float32)
    out_big = jax.block_until_ready(
        model.forward(obs_big, max_batch_tile=256)["state"])
    ref_big = _reference_forward(obs_big, model.params, True)
    ok &= out_big.shape == (600, hidden_sizes[-1])
    ok &= bool(jnp.allclose(out_big, ref_big, atol=1e-4, rtol=1e-4))

    # --- activation=None equivalent (layers folded into one matmul) ---
    model_lin = BasicMLPPallas((in_dim,), hidden_sizes, use_relu=False, seed=1)
    out_lin = jax.block_until_ready(model_lin.forward(obs_small)["state"])
    ref_lin = _reference_forward(obs_small, model_lin.params, False)
    ok &= out_lin.shape == (8, hidden_sizes[-1])
    ok &= bool(jnp.allclose(out_lin, ref_lin, atol=1e-4, rtol=1e-4))

    assert ok
    print("KERNEL_OK")
</pallas_src>

<mosaic_0001>
module attributes {stable_mosaic.version = 11 : i64} {
  func.func @_fused_mlp_kernel(%arg0: i32, %arg1: memref<8x16xf32, #tpu.memory_space<vmem>>, %arg2: memref<16x128xf32, #tpu.memory_space<vmem>>, %arg3: memref<1x128xf32, #tpu.memory_space<vmem>>, %arg4: memref<128x32xf32, #tpu.memory_space<vmem>>, %arg5: memref<1x32xf32, #tpu.memory_space<vmem>>, %arg6: memref<8x32xf32, #tpu.memory_space<vmem>>) attributes {dimension_semantics = [#tpu.dimension_semantics<parallel>], iteration_bounds = array<i64: 1>, scalar_prefetch = 0 : i64, scratch_operands = 0 : i64, tpu.core_type = #tpu.core_type<tc>, window_params = [{transform_indices = @transform_0, window_bounds = array<i64: 8, 16>}, {pipeline_mode = #tpu.pipeline_mode<synchronous>, transform_indices = @transform_1, window_bounds = array<i64: 16, 128>}, {pipeline_mode = #tpu.pipeline_mode<synchronous>, transform_indices = @transform_2, window_bounds = array<i64: 1, 128>}, {pipeline_mode = #tpu.pipeline_mode<synchronous>, transform_indices = @transform_3, window_bounds = array<i64: 128, 32>}, {pipeline_mode = #tpu.pipeline_mode<synchronous>, transform_indices = @transform_4, window_bounds = array<i64: 1, 32>}, {transform_indices = @transform_5, window_bounds = array<i64: 8, 32>}]} {
    %c0 = arith.constant 0 : index
    %c0_0 = arith.constant 0 : index
    %0 = vector.load %arg1[%c0, %c0_0] : memref<8x16xf32, #tpu.memory_space<vmem>>, vector<8x16xf32>
    %c0_1 = arith.constant 0 : index
    %c0_2 = arith.constant 0 : index
    %1 = vector.load %arg2[%c0_1, %c0_2] : memref<16x128xf32, #tpu.memory_space<vmem>>, vector<16x128xf32>
    %c0_3 = arith.constant 0 : index
    %c0_4 = arith.constant 0 : index
    %2 = vector.load %arg3[%c0_3, %c0_4] : memref<1x128xf32, #tpu.memory_space<vmem>>, vector<1x128xf32>
    %cst = arith.constant dense<0.000000e+00> : vector<8x128xf32>
    %3 = tpu.matmul %0, %1, %cst {dimension_numbers = #tpu.dot_dimension_numbers<[1], [0], [0], [1], [0, 0, 1, 1], [], []>} : vector<8x16xf32>, vector<16x128xf32>, vector<8x128xf32> -> vector<8x128xf32>
    %4 = vector.broadcast %2 : vector<1x128xf32> to vector<8x128xf32>
    %5 = arith.addf %3, %4 : vector<8x128xf32>
    %cst_5 = arith.constant 0.000000e+00 : f32
    %6 = vector.broadcast %cst_5 : f32 to vector<8x128xf32>
    %7 = arith.maximumf %5, %6 : vector<8x128xf32>
    %c0_6 = arith.constant 0 : index
    %c0_7 = arith.constant 0 : index
    %8 = vector.load %arg4[%c0_6, %c0_7] : memref<128x32xf32, #tpu.memory_space<vmem>>, vector<128x32xf32>
    %c0_8 = arith.constant 0 : index
    %c0_9 = arith.constant 0 : index
    %9 = vector.load %arg5[%c0_8, %c0_9] : memref<1x32xf32, #tpu.memory_space<vmem>>, vector<1x32xf32>
    %cst_10 = arith.constant dense<0.000000e+00> : vector<8x32xf32>
    %10 = tpu.matmul %7, %8, %cst_10 {dimension_numbers = #tpu.dot_dimension_numbers<[1], [0], [0], [1], [0, 0, 1, 1], [], []>} : vector<8x128xf32>, vector<128x32xf32>, vector<8x32xf32> -> vector<8x32xf32>
    %11 = vector.broadcast %9 : vector<1x32xf32> to vector<8x32xf32>
    %12 = arith.addf %10, %11 : vector<8x32xf32>
    %cst_11 = arith.constant 0.000000e+00 : f32
    %13 = vector.broadcast %cst_11 : f32 to vector<8x32xf32>
    %14 = arith.maximumf %12, %13 : vector<8x32xf32>
    %c0_12 = arith.constant 0 : index
    %c0_13 = arith.constant 0 : index
    %15 = vector.load %arg6[%c0_12, %c0_13] : memref<8x32xf32, #tpu.memory_space<vmem>>, vector<8x32xf32>
    tpu.vector_store %arg6[%c0_12, %c0_13], %14 {strides = array<i32>} : memref<8x32xf32, #tpu.memory_space<vmem>>, vector<8x32xf32>,
    return
  }
  func.func @transform_0(%arg0: i32) -> (i32, i32) {
    %c0_i32 = arith.constant 0 : i32
    %c0_i32_0 = arith.constant 0 : i32
    return %arg0, %c0_i32 : i32, i32
  }
  func.func @transform_1(%arg0: i32) -> (i32, i32) {
    %c0_i32 = arith.constant 0 : i32
    %c0_i32_0 = arith.constant 0 : i32
    %c0_i32_1 = arith.constant 0 : i32
    return %c0_i32, %c0_i32_0 : i32, i32
  }
  func.func @transform_2(%arg0: i32) -> (i32, i32) {
    %c0_i32 = arith.constant 0 : i32
    %c0_i32_0 = arith.constant 0 : i32
    %c0_i32_1 = arith.constant 0 : i32
    return %c0_i32, %c0_i32_0 : i32, i32
  }
  func.func @transform_3(%arg0: i32) -> (i32, i32) {
    %c0_i32 = arith.constant 0 : i32
    %c0_i32_0 = arith.constant 0 : i32
    %c0_i32_1 = arith.constant 0 : i32
    return %c0_i32, %c0_i32_0 : i32, i32
  }
  func.func @transform_4(%arg0: i32) -> (i32, i32) {
    %c0_i32 = arith.constant 0 : i32
    %c0_i32_0 = arith.constant 0 : i32
    %c0_i32_1 = arith.constant 0 : i32
    return %c0_i32, %c0_i32_0 : i32, i32
  }
  func.func @transform_5(%arg0: i32) -> (i32, i32) {
    %c0_i32 = arith.constant 0 : i32
    %c0_i32_0 = arith.constant 0 : i32
    return %arg0, %c0_i32 : i32, i32
  }
}

</mosaic_0001>

<llo_original>
// kernel: tpu_custom_call.1
$region0: #{tpu_custom_call.1}
  #allocation0 [shape = 'u32[]', space=smem, size = 0x4, offset = 0x4, fixed_abs, tag = 'smem constant byte address 0x4 - core index']
  #allocation1 [shape = 'u32[144,128]{1,0:T(1,128)}', space=vmem, size = 0x12000, scoped, tag = 'internal scratch']
  %s0 = inlined_call_operand.vmem [shape: f32[8,16], index: 0, kind: input, shape index: {}]
  %s1 = inlined_call_operand.vmem [shape: f32[16,128], index: 1, kind: input, shape index: {}]
  %s2 = inlined_call_operand.vmem [shape: f32[1,128], index: 2, kind: input, shape index: {}]
  %s3 = inlined_call_operand.vmem [shape: f32[128,32], index: 3, kind: input, shape index: {}]
  %s4 = inlined_call_operand.vmem [shape: f32[1,32], index: 4, kind: input, shape index: {}]
  %s5 = inlined_call_operand.hbm [shape: f32[8,32], index: 5, kind: output, shape index: {}]
  %s6 = sld [smem:[#allocation0]]
  $region30: #{tpu_custom_call.1} parent=0
    _
  %s8 = ssub.s32 1, %s6
  %s9 = scalar_select 0, %s8, %s6
  $region1: #{tpu_custom_call.1} parent=0
    #allocation2 [shape = 'u8[4096]{0}', space=vmem, size = 0x1000, scoped, tag = 'output window, operand 0, single buffered']
    #allocation3 [shape = 's32[1]{0}', space=sflag, size = 0x4, scoped, tag = 'scoped memory for tpu_custom_call.1']
    %10 = vsyncpa [#allocation3], 0
    // Predicated region
    $region2: #{tpu_custom_call.1} parent=1 // pred_check
      _
    $region3: #{tpu_custom_call.1} parent=1 // pred_check_branch
      %12 = sbr.rel (0) target = $region5
    $region4: #{tpu_custom_call.1} parent=1 // pred_region
      _
    $region5: #{tpu_custom_call.1} parent=1 // pred_fallthru
      _
    // Predicated region
    $region6: #{tpu_custom_call.1} parent=1 // pred_check
      _
    $region7: #{tpu_custom_call.1} parent=1 // pred_check_branch
      %14 = sbr.rel (0) target = $region9
    $region8: #{tpu_custom_call.1} parent=1 // pred_region
      _
    $region9: #{tpu_custom_call.1} parent=1 // pred_fallthru
      _
    // Predicated region
    $region10: #{tpu_custom_call.1} parent=1 // pred_check
      _
    $region11: #{tpu_custom_call.1} parent=1 // pred_check_branch
      %16 = sbr.rel (0) target = $region13
    $region12: #{tpu_custom_call.1} parent=1 // pred_region
      _
    $region13: #{tpu_custom_call.1} parent=1 // pred_fallthru
      _
    // Predicated region
    $region14: #{tpu_custom_call.1} parent=1 // pred_check
      _
    $region15: #{tpu_custom_call.1} parent=1 // pred_check_branch
      %18 = sbr.rel (0) target = $region17
    $region16: #{tpu_custom_call.1} parent=1 // pred_region
      _
    $region17: #{tpu_custom_call.1} parent=1 // pred_fallthru
      _
    // Predicated region
    $region18: #{tpu_custom_call.1} parent=1 // pred_check
      _
    $region19: #{tpu_custom_call.1} parent=1 // pred_check_branch
      %20 = sbr.rel (0) target = $region21
    $region20: #{tpu_custom_call.1} parent=1 // pred_region
      _
    $region21: #{tpu_custom_call.1} parent=1 // pred_fallthru
      _
    %v21 = vld [vmem:[%s0] sm:$0xff]
    %v22 = vld [vmem:[%s1] sm:$0xff]
    %v23 = vld [vmem:[%s1 + $0x8] sm:$0xff]
    %v24 = vld [vmem:[%s2] sm:$0x1]
    %v26 = vlaneseq
    %v27 = vshrl.u32 %v26, 7
    %v28 = vsub.s32 0, %v27
    %v29 = vrot.slane %v24, %v28
    %vm31 = vcmask 130048
    %v33 = vsel %vm31, %v21, 0
    %35 = vmatprep.subr.mxu0 0.0
    %36 = vmatpush1.msra.mxu0 %v22
    %37 = vmatprep.subr.mxu0 0.0
    %38 = vmatpush1.msra.mxu0 %v23
    %39 = vmatprep.subr.mxu0 0.0
    %40 = vmatpush1.msra.mxu0 0.0
    %41 = vmatprep.subr.mxu0 0.0
    %42 = vmatpush1.msra.mxu0 0.0
    %43 = vmatprep.subr.mxu0 0.0
    %44 = vmatpush1.msra.mxu0 0.0
    %45 = vmatprep.subr.mxu0 0.0
    %46 = vmatpush1.msra.mxu0 0.0
    %47 = vmatprep.subr.mxu0 0.0
    %48 = vmatpush1.msra.mxu0 0.0
    %49 = vmatprep.subr.mxu0 0.0
    %50 = vmatpush1.msra.mxu0 0.0
    %51 = vmatprep.subr.mxu0 0.0
    %52 = vmatpush1.msra.mxu0 0.0
    %53 = vmatprep.subr.mxu0 0.0
    %54 = vmatpush1.msra.mxu0 0.0
    %55 = vmatprep.subr.mxu0 0.0
    %56 = vmatpush1.msra.mxu0 0.0
    %57 = vmatprep.subr.mxu0 0.0
    %58 = vmatpush1.msra.mxu0 0.0
    %59 = vmatprep.subr.mxu0 0.0
    %60 = vmatpush1.msra.mxu0 0.0
    %61 = vmatprep.subr.mxu0 0.0
    %62 = vmatpush1.msra.mxu0 0.0
    %63 = vmatprep.subr.mxu0 0.0
    %64 = vmatpush1.msra.mxu0 0.0
    %65 = vmatprep.subr.mxu0 0.0
    %66 = vmatpush1.msra.mxu0 0.0
    %67 = vmatprep.subr.mxu0 0.0
    %68 = vmatpush1.msra.mxu0 0.0
    %69 = vmatprep.subr.mxu0 0.0
    %70 = vmatpush1.msra.mxu0 0.0
    %71 = vmatprep.subr.mxu0 0.0
    %72 = vmatpush1.msra.mxu0 0.0
    %73 = vmatprep.subr.mxu0 0.0
    %74 = vmatpush1.msra.mxu0 0.0
    %75 = vmatprep.subr.mxu0 0.0
    %76 = vmatpush1.msra.mxu0 0.0
    %77 = vmatprep.subr.mxu0 0.0
    %78 = vmatpush1.msra.mxu0 0.0
    %79 = vmatprep.subr.mxu0 0.0
    %80 = vmatpush1.msra.mxu0 0.0
    %81 = vmatprep.subr.mxu0 0.0
    %82 = vmatpush1.msra.mxu0 0.0
    %83 = vmatprep.subr.mxu0 0.0
    %84 = vmatpush1.msra.mxu0 0.0
    %85 = vmatprep.subr.mxu0 0.0
    %86 = vmatpush1.msra.mxu0 0.0
    %87 = vmatprep.subr.mxu0 0.0
    %88 = vmatpush1.msra.mxu0 0.0
    %89 = vmatprep.subr.mxu0 0.0
    %90 = vmatpush1.msra.mxu0 0.0
    %91 = vmatprep.subr.mxu0 0.0
    %92 = vmatpush1.msra.mxu0 0.0
    %93 = vmatprep.subr.mxu0 0.0
    %94 = vmatpush1.msra.mxu0 0.0
    %95 = vmatprep.subr.mxu0 0.0
    %96 = vmatpush1.msra.mxu0 0.0
    %97 = vmatprep.subr.mxu0 0.0
    %98 = vmatpush1.msra.mxu0 0.0
    %99 = vmatprep.mubr.f32.mxu0 0.0
    %100 = vmatmul.mubr.f32.gmra.mrb[0].mxu0 %v33
    %v101 = vpop.f32.mrb[0].mxu0
    %v102 = vadd.f32 %v29, %v101
    %v103 = vpop.f32.mrb[0].mxu0
    %104 = vdwg.mxu0
    %v105 = vmax.f32 %v102, 0.0
    %v106 = vld [vmem:[%s3] sm:$0xff]
    %v107 = vld [vmem:[%s3 + $0x8] sm:$0xff]
    %v108 = vld [vmem:[%s3 + $0x10] sm:$0xff]
    %v109 = vld [vmem:[%s3 + $0x18] sm:$0xff]
    %v110 = vld [vmem:[%s3 + $0x20] sm:$0xff]
    %v111 = vld [vmem:[%s3 + $0x28] sm:$0xff]
    %v112 = vld [vmem:[%s3 + $0x30] sm:$0xff]
    %v113 = vld [vmem:[%s3 + $0x38] sm:$0xff]
    %v114 = vld [vmem:[%s3 + $0x40] sm:$0xff]
    %v115 = vld [vmem:[%s3 + $0x48] sm:$0xff]
    %v116 = vld [vmem:[%s3 + $0x50] sm:$0xff]
    %v117 = vld [vmem:[%s3 + $0x58] sm:$0xff]
    %v118 = vld [vmem:[%s3 + $0x60] sm:$0xff]
    %v119 = vld [vmem:[%s3 + $0x68] sm:$0xff]
    %v120 = vld [vmem:[%s3 + $0x70] sm:$0xff]
    %v121 = vld [vmem:[%s3 + $0x78] sm:$0xff]
    %v122 = vld [vmem:[%s4] sm:$0x1]
    %v124 = vlaneseq
    %v125 = vshrl.u32 %v124, 7
    %v126 = vsub.s32 0, %v125
    %v127 = vrot.slane %v122, %v126
    %129 = vmatprep.subr.mxu0 0.0
    %130 = vmatpush1.msra.mxu0 %v106
    %131 = vmatprep.subr.mxu0 0.0
    %132 = vmatpush1.msra.mxu0 %v107
    %133 = vmatprep.subr.mxu0 0.0
    %134 = vmatpush1.msra.mxu0 %v108
    %135 = vmatprep.subr.mxu0 0.0
    %136 = vmatpush1.msra.mxu0 %v109
    %137 = vmatprep.subr.mxu0 0.0
    %138 = vmatpush1.msra.mxu0 %v110
    %139 = vmatprep.subr.mxu0 0.0
    %140 = vmatpush1.msra.mxu0 %v111
    %141 = vmatprep.subr.mxu0 0.0
    %142 = vmatpush1.msra.mxu0 %v112
    %143 = vmatprep.subr.mxu0 0.0
    %144 = vmatpush1.msra.mxu0 %v113
    %145 = vmatprep.subr.mxu0 0.0
    %146 = vmatpush1.msra.mxu0 %v114
    %147 = vmatprep.subr.mxu0 0.0
    %148 = vmatpush1.msra.mxu0 %v115
    %149 = vmatprep.subr.mxu0 0.0
    %150 = vmatpush1.msra.mxu0 %v116
    %151 = vmatprep.subr.mxu0 0.0
    %152 = vmatpush1.msra.mxu0 %v117
    %153 = vmatprep.subr.mxu0 0.0
    %154 = vmatpush1.msra.mxu0 %v118
    %155 = vmatprep.subr.mxu0 0.0
    %156 = vmatpush1.msra.mxu0 %v119
    %157 = vmatprep.subr.mxu0 0.0
    %158 = vmatpush1.msra.mxu0 %v120
    %159 = vmatprep.subr.mxu0 0.0
    %160 = vmatpush1.msra.mxu0 %v121
    %161 = vmatprep.subr.mxu0 0.0
    %162 = vmatpush1.msra.mxu0 0.0
    %163 = vmatprep.subr.mxu0 0.0
    %164 = vmatpush1.msra.mxu0 0.0
    %165 = vmatprep.subr.mxu0 0.0
    %166 = vmatpush1.msra.mxu0 0.0
    %167 = vmatprep.subr.mxu0 0.0
    %168 = vmatpush1.msra.mxu0 0.0
    %169 = vmatprep.subr.mxu0 0.0
    %170 = vmatpush1.msra.mxu0 0.0
    %171 = vmatprep.subr.mxu0 0.0
    %172 = vmatpush1.msra.mxu0 0.0
    %173 = vmatprep.subr.mxu0 0.0
    %174 = vmatpush1.msra.mxu0 0.0
    %175 = vmatprep.subr.mxu0 0.0
    %176 = vmatpush1.msra.mxu0 0.0
    %177 = vmatprep.subr.mxu0 0.0
    %178 = vmatpush1.msra.mxu0 0.0
    %179 = vmatprep.subr.mxu0 0.0
    %180 = vmatpush1.msra.mxu0 0.0
    %181 = vmatprep.subr.mxu0 0.0
    %182 = vmatpush1.msra.mxu0 0.0
    %183 = vmatprep.subr.mxu0 0.0
    %184 = vmatpush1.msra.mxu0 0.0
    %185 = vmatprep.subr.mxu0 0.0
    %186 = vmatpush1.msra.mxu0 0.0
    %187 = vmatprep.subr.mxu0 0.0
    %188 = vmatpush1.msra.mxu0 0.0
    %189 = vmatprep.subr.mxu0 0.0
    %190 = vmatpush1.msra.mxu0 0.0
    %191 = vmatprep.subr.mxu0 0.0
    %192 = vmatpush1.msra.mxu0 0.0
    %193 = vmatprep.mubr.f32.mxu0 0.0
    %194 = vmatmul.mubr.f32.gmra.mrb[0].mxu0 %v105
    %v195 = vpop.f32.mrb[0].mxu0
    %v196 = vadd.f32 %v127, %v195
    %v197 = vpop.f32.mrb[0].mxu0
    %198 = vdwg.mxu0
    %v199 = vmax.f32 %v196, 0.0
    %vm200 = vcmask 261120
    %201 = vst.msk [vmem:[#allocation2] sm:$0xff] %vm200, %v199
    // Predicated region
    $region22: #{tpu_custom_call.1} parent=1 // pred_check
      _
    $region23: #{tpu_custom_call.1} parent=1 // pred_check_branch
      %203 = sbr.rel (0) target = $region25
    $region24: #{tpu_custom_call.1} parent=1 // pred_region
      %s205 = ssub.s32 128, 128
      %206 = vsyncadd [#allocation3], %s205
      %s208 = sshll.u32 [#allocation2], 4
      %s209 = int_to_ptr.vmem [resolvable:$true] %s208
      %211 = dma.vmem_to_hbm [thread:$0]  %s209, 128, %s5, [#allocation3]
    $region25: #{tpu_custom_call.1} parent=1 // pred_fallthru
      _
    // Predicated region
    $region26: #{tpu_custom_call.1} parent=1 // pred_check
      _
    $region27: #{tpu_custom_call.1} parent=1 // pred_check_branch
      %213 = sbr.rel (0) target = $region29
    $region28: #{tpu_custom_call.1} parent=1 // pred_region
      %214 = dma.done [#allocation3], 128
    $region29: #{tpu_custom_call.1} parent=1 // pred_fallthru
      _
    %215 = vsyncpa [#allocation3], 1

</llo_original>
